<compile_context>
chip_gen: v7x
topology: tpu7x:2x2x1
jax: 0.10.0
libtpu: 0.0.40
codegen_flags: <defaults>
</compile_context>

<pallas_src>
import math

import jax
import jax.numpy as jnp
from jax.experimental import pallas as pl
from jax.experimental.pallas import tpu as pltpu


def add_noise_kernel(scale_ref, x_ref, noise_ref, out_ref):
    """One grid step = a (TB, TD) lane-dense slab of flattened images.

    scale_ref : VMEM f32[TB, 2]   col 0 = sqrt(alpha_hat[t]), col 1 = sqrt(1 - alpha_hat[t])
    x_ref     : VMEM [TB, TD]     f32 or bf16
    noise_ref : VMEM [TB, TD]     f32 or bf16
    out_ref   : VMEM [TB, TD]     same dtype as x
    """
    s = scale_ref[...]                       # f32[TB, 2]
    sqrt_a = s[:, 0:1]                       # f32[TB, 1]
    sqrt_1ma = s[:, 1:2]                     # f32[TB, 1]
    xf = x_ref[...].astype(jnp.float32)
    nf = noise_ref[...].astype(jnp.float32)
    out_ref[...] = (sqrt_a * xf + sqrt_1ma * nf).astype(out_ref.dtype)


def _floor_mult(v, m):
    return max(m, (v // m) * m)


def _pick_tiles(B, D, itemsize, *, slab_target_bytes=4 << 20,
                min_split_bytes=2 << 20):
    """Pick (TB, TD) for a (B, D) lane-dense HBM stream.

    - Each slab per streamed array is <= slab_target_bytes (default 4 MiB), so
      3 arrays x 2 pipeline buffers stay ~<= 24 MiB resident.
    - TD is a multiple of 128 (or the full D); TB a multiple of 8 (or full B).
    - If the whole problem exceeds min_split_bytes and the grid would be a
      single block, split it so v7x's two TensorCores both get work and the
      pipeline has something to overlap.
    """
    row_bytes = D * itemsize

    # --- choose TD (D-axis tile) ---
    if 8 * row_bytes <= slab_target_bytes or D <= 128:
        TD = D
    else:
        TD = min(D, _floor_mult(slab_target_bytes // (8 * itemsize), 128))

    # --- choose TB (batch-axis tile) ---
    rows = max(1, slab_target_bytes // max(1, TD * itemsize))
    if rows >= B:
        TB = B
    else:
        TB = min(B, _floor_mult(rows, 8))

    # --- guarantee >= 2 grid blocks for non-trivial sizes (v7x megacore) ---
    total_bytes = B * row_bytes
    if total_bytes > min_split_bytes and pl.cdiv(B, TB) * pl.cdiv(D, TD) < 2:
        if TD >= 256:
            TD = _floor_mult(TD // 2, 128)
        elif TB >= 16:
            TB = _floor_mult(TB // 2, 8)
        # else: problem too small/narrow to split cleanly; keep one block.

    return TB, TD


class DiffusionModelPallas:
    """JAX/Pallas port of DiffusionModel (noise schedule + add_noise)."""

    def __init__(self, time_steps, beta_start=0.001, beta_end=0.02,
                 image_dims=(4, 16, 16)):
        self.time_steps = time_steps
        self.image_dims = image_dims
        c, h, w = image_dims
        self.img_size, self.input_channels = h, c
        # schedule (plain-JAX glue; identical math to torch.linspace / cumprod)
        self.betas = jnp.linspace(beta_start, beta_end, time_steps,
                                  dtype=jnp.float32)
        self.alphas = 1.0 - self.betas
        self.alpha_hats = jnp.cumprod(self.alphas, axis=-1)

    def add_noise(self, x, ts, noise=None, key=None, *,
                  slab_target_bytes=4 << 20):
        """x: [B,C,H,W] f32/bf16, ts: [B] int, noise: [B,C,H,W] (or None)."""
        if noise is None:
            if key is None:
                key = jax.random.PRNGKey(0)
            noise = jax.random.normal(key, x.shape, dtype=x.dtype)

        B = x.shape[0]
        D = int(math.prod(x.shape[1:]))          # C*H*W, lane-dense last dim
        x2 = x.reshape(B, D)
        n2 = noise.reshape(B, D)

        # Per-example scales, computed once in plain JAX, packed into f32[B, 2].
        ts = jnp.clip(ts.astype(jnp.int32), 0, self.time_steps - 1)
        a = self.alpha_hats[ts]
        scales = jnp.stack([jnp.sqrt(a), jnp.sqrt(1.0 - a)],
                           axis=-1).astype(jnp.float32)          # [B, 2]

        itemsize = x.dtype.itemsize
        TB, TD = _pick_tiles(B, D, itemsize,
                             slab_target_bytes=slab_target_bytes)
        grid = (pl.cdiv(B, TB), pl.cdiv(D, TD))                  # D is inner

        # Scale block is constant along the inner (D) axis -> not re-DMA'd.
        scale_spec = pl.BlockSpec((TB, 2), lambda i, j: (i, 0))
        img_spec = pl.BlockSpec((TB, TD), lambda i, j: (i, j))

        # Explicit VMEM budget: 3 streamed arrays x 2 buffers x slab + margin.
        slab_bytes = TB * TD * itemsize
        vmem_limit = 6 * slab_bytes + 4 * TB * 512 + (2 << 20)
        vmem_limit = int(min(max(vmem_limit, 8 << 20), 48 << 20))

        noised2 = pl.pallas_call(
            add_noise_kernel,
            out_shape=jax.ShapeDtypeStruct((B, D), x.dtype),
            grid_spec=pl.GridSpec(
                grid=grid,
                in_specs=[scale_spec, img_spec, img_spec],
                out_specs=img_spec,
            ),
            compiler_params=pltpu.CompilerParams(
                dimension_semantics=("parallel", "parallel"),
                vmem_limit_bytes=vmem_limit),
        )(scales, x2, n2)

        return noised2.reshape(x.shape), noise

    def forward(self, x, t):
        # TODO(synk): UNet(input_channels=2*c, output_channels=c) is not
        # defined in the provided module source; forward cannot be implemented.
        raise NotImplementedError("UNet is not defined in the source module")


if __name__ == "__main__":
    # Small, deterministic example shapes consistent with the module:
    # image_dims=(C=4, H=16, W=16), batch=2, time_steps=8.
    B = 2
    C, H, W = 4, 16, 16
    T = 8

    key = jax.random.PRNGKey(0)
    kx, knoise, kt = jax.random.split(key, 3)
    x = jax.random.normal(kx, (B, C, H, W), dtype=jnp.float32)
    noise = jax.random.normal(knoise, (B, C, H, W), dtype=jnp.float32)
    ts = jax.random.randint(kt, (B,), 0, T, dtype=jnp.int32)

    model = DiffusionModelPallas(time_steps=T, image_dims=(C, H, W))

    def reference(xv, nv, tsv):
        a = model.alpha_hats[jnp.clip(tsv, 0, T - 1)].astype(jnp.float32)
        return (jnp.sqrt(a)[:, None, None, None] * xv.astype(jnp.float32)
                + jnp.sqrt(1.0 - a)[:, None, None, None] * nv.astype(jnp.float32))

    # --- test 1: f32, single-block grid -----------------------------------
    noised, noise_out = model.add_noise(x, ts, noise)
    noised = jax.block_until_ready(noised)
    ref = reference(x, noise, ts)
    assert noised.shape == (B, C, H, W) and noise_out.shape == (B, C, H, W)
    assert jnp.allclose(noised, ref, atol=1e-5, rtol=1e-5), "f32 mismatch"

    # --- test 2: bf16 I/O (f32 math in-kernel) -----------------------------
    x_bf = x.astype(jnp.bfloat16)
    n_bf = noise.astype(jnp.bfloat16)
    noised_bf, _ = model.add_noise(x_bf, ts, n_bf)
    noised_bf = jax.block_until_ready(noised_bf)
    ref_bf = reference(x_bf, n_bf, ts).astype(jnp.bfloat16)
    assert noised_bf.dtype == jnp.bfloat16
    assert jnp.allclose(noised_bf.astype(jnp.float32),
                        ref_bf.astype(jnp.float32),
                        atol=2e-2, rtol=2e-2), "bf16 mismatch"

    # --- test 3: multi-block grid (B- and D-tiling, partial last B block) --
    B3 = 10
    k3x, k3n, k3t = jax.random.split(jax.random.PRNGKey(1), 3)
    x3 = jax.random.normal(k3x, (B3, C, H, W), dtype=jnp.float32)
    n3 = jax.random.normal(k3n, (B3, C, H, W), dtype=jnp.float32)
    ts3 = jax.random.randint(k3t, (B3,), 0, T, dtype=jnp.int32)
    # Tiny slab target forces grid=(2, 4): TB=8 (partial last block), TD=256.
    noised3, _ = model.add_noise(x3, ts3, n3, slab_target_bytes=8 << 10)
    noised3 = jax.block_until_ready(noised3)
    ref3 = reference(x3, n3, ts3)
    assert jnp.allclose(noised3, ref3, atol=1e-5, rtol=1e-5), "tiled mismatch"

    print("KERNEL_OK")
</pallas_src>

<mosaic_0001>
module attributes {stable_mosaic.version = 11 : i64} {
  func.func @add_noise_kernel(%arg0: i32, %arg1: i32, %arg2: memref<2x2xf32, #tpu.memory_space<vmem>>, %arg3: memref<2x1024xf32, #tpu.memory_space<vmem>>, %arg4: memref<2x1024xf32, #tpu.memory_space<vmem>>, %arg5: memref<2x1024xf32, #tpu.memory_space<vmem>>) attributes {dimension_semantics = [#tpu.dimension_semantics<parallel>, #tpu.dimension_semantics<parallel>], iteration_bounds = array<i64: 1, 1>, scalar_prefetch = 0 : i64, scratch_operands = 0 : i64, tpu.core_type = #tpu.core_type<tc>, window_params = [{transform_indices = @transform_0, window_bounds = array<i64: 2, 2>}, {transform_indices = @transform_1, window_bounds = array<i64: 2, 1024>}, {transform_indices = @transform_2, window_bounds = array<i64: 2, 1024>}, {transform_indices = @transform_3, window_bounds = array<i64: 2, 1024>}]} {
    %c0 = arith.constant 0 : index
    %c0_0 = arith.constant 0 : index
    %0 = vector.load %arg2[%c0, %c0_0] : memref<2x2xf32, #tpu.memory_space<vmem>>, vector<2x2xf32>
    %1 = vector.extract_strided_slice %0 {offsets = [0, 0], sizes = [2, 1], strides = [1, 1]} : vector<2x2xf32> to vector<2x1xf32>
    %2 = vector.extract_strided_slice %0 {offsets = [0, 1], sizes = [2, 1], strides = [1, 1]} : vector<2x2xf32> to vector<2x1xf32>
    %c0_1 = arith.constant 0 : index
    %c0_2 = arith.constant 0 : index
    %3 = vector.load %arg3[%c0_1, %c0_2] : memref<2x1024xf32, #tpu.memory_space<vmem>>, vector<2x1024xf32>
    %c0_3 = arith.constant 0 : index
    %c0_4 = arith.constant 0 : index
    %4 = vector.load %arg4[%c0_3, %c0_4] : memref<2x1024xf32, #tpu.memory_space<vmem>>, vector<2x1024xf32>
    %5 = vector.broadcast %1 : vector<2x1xf32> to vector<2x1024xf32>
    %6 = arith.mulf %5, %3 : vector<2x1024xf32>
    %7 = vector.broadcast %2 : vector<2x1xf32> to vector<2x1024xf32>
    %8 = arith.mulf %7, %4 : vector<2x1024xf32>
    %9 = arith.addf %6, %8 : vector<2x1024xf32>
    %c0_5 = arith.constant 0 : index
    %c0_6 = arith.constant 0 : index
    %10 = vector.load %arg5[%c0_5, %c0_6] : memref<2x1024xf32, #tpu.memory_space<vmem>>, vector<2x1024xf32>
    tpu.vector_store %arg5[%c0_5, %c0_6], %9 {strides = array<i32>} : memref<2x1024xf32, #tpu.memory_space<vmem>>, vector<2x1024xf32>,
    return
  }
  func.func @transform_0(%arg0: i32, %arg1: i32) -> (i32, i32) {
    %c0_i32 = arith.constant 0 : i32
    %c0_i32_0 = arith.constant 0 : i32
    return %arg0, %c0_i32 : i32, i32
  }
  func.func @transform_1(%arg0: i32, %arg1: i32) -> (i32, i32) {
    %c0_i32 = arith.constant 0 : i32
    return %arg0, %arg1 : i32, i32
  }
  func.func @transform_2(%arg0: i32, %arg1: i32) -> (i32, i32) {
    %c0_i32 = arith.constant 0 : i32
    return %arg0, %arg1 : i32, i32
  }
  func.func @transform_3(%arg0: i32, %arg1: i32) -> (i32, i32) {
    %c0_i32 = arith.constant 0 : i32
    return %arg0, %arg1 : i32, i32
  }
}

</mosaic_0001>

<llo_original>
// kernel: tpu_custom_call.1
$region0: #{tpu_custom_call.1}
  #allocation0 [shape = 'u32[]', space=smem, size = 0x4, offset = 0x4, fixed_abs, tag = 'smem constant byte address 0x4 - core index']
  #allocation1 [shape = 'u32[144,128]{1,0:T(1,128)}', space=vmem, size = 0x12000, scoped, tag = 'internal scratch']
  %s0 = inlined_call_operand.hbm [shape: f32[2,2], index: 0, kind: input, shape index: {}]
  %s1 = inlined_call_operand.hbm [shape: f32[2,1024], index: 1, kind: input, shape index: {}]
  %s2 = inlined_call_operand.hbm [shape: f32[2,1024], index: 2, kind: input, shape index: {}]
  %s3 = inlined_call_operand.hbm [shape: f32[2,1024], index: 3, kind: output, shape index: {}]
  %s4 = sld [smem:[#allocation0]]
  $region34: #{tpu_custom_call.1} parent=0
    _
  %s6 = ssub.s32 1, %s4
  %s7 = scalar_select 0, %s6, %s4
  $region1: #{tpu_custom_call.1} parent=0
    #allocation2 [shape = 'u8[1024]{0}', space=vmem, size = 0x400, scoped, tag = 'input window, operand 0, single buffered']
    #allocation3 [shape = 's32[1]{0}', space=sflag, size = 0x4, scoped, tag = 'scoped memory for tpu_custom_call.1']
    #allocation4 [shape = 's32[1]{0}', space=sflag, size = 0x4, scoped, tag = 'scoped memory for tpu_custom_call.1']
    #allocation5 [shape = 'u8[8192]{0}', space=vmem, size = 0x2000, scoped, tag = 'input window, operand 1, single buffered']
    #allocation6 [shape = 's32[1]{0}', space=sflag, size = 0x4, scoped, tag = 'scoped memory for tpu_custom_call.1']
    #allocation7 [shape = 'u8[8192]{0}', space=vmem, size = 0x2000, scoped, tag = 'input window, operand 2, single buffered']
    #allocation8 [shape = 'u8[8192]{0}', space=vmem, size = 0x2000, scoped, tag = 'output window, operand 0, single buffered']
    %8 = vsyncpa [#allocation3], 0
    %9 = vsyncpa [#allocation6], 0
    %10 = vsyncpa [#allocation4], 0
    // Predicated region
    $region2: #{tpu_custom_call.1} parent=1 // pred_check
      _
    $region3: #{tpu_custom_call.1} parent=1 // pred_check_branch
      %12 = sbr.rel (0) target = $region5
    $region4: #{tpu_custom_call.1} parent=1 // pred_region
      %s14 = ssub.s32 32, 32
      %15 = vsyncadd [#allocation3], %s14
      %s17 = sshll.u32 [#allocation2], 4
      %s18 = int_to_ptr.vmem [resolvable:$true] %s17
      %20 = dma.hbm_to_vmem [thread:$0]  %s0, 32, %s18, [#allocation3]
    $region5: #{tpu_custom_call.1} parent=1 // pred_fallthru
      _
    // Predicated region
    $region6: #{tpu_custom_call.1} parent=1 // pred_check
      _
    $region7: #{tpu_custom_call.1} parent=1 // pred_check_branch
      %22 = sbr.rel (0) target = $region9
    $region8: #{tpu_custom_call.1} parent=1 // pred_region
      %s24 = ssub.s32 256, 256
      %25 = vsyncadd [#allocation6], %s24
      %s27 = sshll.u32 [#allocation5], 4
      %s28 = int_to_ptr.vmem [resolvable:$true] %s27
      %30 = dma.hbm_to_vmem [thread:$0]  %s1, 256, %s28, [#allocation6]
    $region9: #{tpu_custom_call.1} parent=1 // pred_fallthru
      _
    // Predicated region
    $region10: #{tpu_custom_call.1} parent=1 // pred_check
      _
    $region11: #{tpu_custom_call.1} parent=1 // pred_check_branch
      %32 = sbr.rel (0) target = $region13
    $region12: #{tpu_custom_call.1} parent=1 // pred_region
      %s34 = ssub.s32 256, 256
      %35 = vsyncadd [#allocation6], %s34
      %s37 = sshll.u32 [#allocation7], 4
      %s38 = int_to_ptr.vmem [resolvable:$true] %s37
      %40 = dma.hbm_to_vmem [thread:$0]  %s2, 256, %s38, [#allocation6]
    $region13: #{tpu_custom_call.1} parent=1 // pred_fallthru
      _
    // Predicated region
    $region14: #{tpu_custom_call.1} parent=1 // pred_check
      _
    $region15: #{tpu_custom_call.1} parent=1 // pred_check_branch
      %42 = sbr.rel (0) target = $region17
    $region16: #{tpu_custom_call.1} parent=1 // pred_region
      %43 = dma.done [#allocation3], 32
    $region17: #{tpu_custom_call.1} parent=1 // pred_fallthru
      _
    // Predicated region
    $region18: #{tpu_custom_call.1} parent=1 // pred_check
      _
    $region19: #{tpu_custom_call.1} parent=1 // pred_check_branch
      %45 = sbr.rel (0) target = $region21
    $region20: #{tpu_custom_call.1} parent=1 // pred_region
      %46 = dma.done [#allocation6], 256
    $region21: #{tpu_custom_call.1} parent=1 // pred_fallthru
      _
    // Predicated region
    $region22: #{tpu_custom_call.1} parent=1 // pred_check
      _
    $region23: #{tpu_custom_call.1} parent=1 // pred_check_branch
      %48 = sbr.rel (0) target = $region25
    $region24: #{tpu_custom_call.1} parent=1 // pred_region
      %49 = dma.done [#allocation6], 256
    $region25: #{tpu_custom_call.1} parent=1 // pred_fallthru
      _
    %v50 = vld [vmem:[#allocation2] sm:$0x3]
    %v51 = vld [vmem:[#allocation5] sm:$0xff]
    %v52 = vld [vmem:[#allocation5 + $0x8] sm:$0xff]
    %v53 = vld [vmem:[#allocation7] sm:$0xff]
    %v54 = vld [vmem:[#allocation7 + $0x8] sm:$0xff]
    %56 = vset.pattern.permute.xlu0 0
    %57 = vperm.xlu0 %56, %v50
    %v58 = vpop.permute.xlu0 %57
    %v62 = vcombine.high %v51, %v51
    %v64 = vunpack.c.l.s4 1983009808
    %v65 = vunpack.c.0.s8 %v64
    %v66 = vlaneseq
    %v67 = vshrl.u32 %v66, 7
    %v68 = vsub.s32 %v65, %v67
    %v69 = vrot.slane %v51, %v68
    %v71 = vunpack.c.l.s4 1983009808
    %v72 = vunpack.c.0.s8 %v71
    %v73 = vlaneseq
    %v74 = vshrl.u32 %v73, 7
    %v75 = vsub.s32 %v72, %v74
    %v76 = vrot.slane %v62, %v75
    %v77 = vcombine.high %v69, %v69
    %v78 = vcombine.high %v76, %v76
    %v79 = vcombine.high %v52, %v52
    %v81 = vunpack.c.l.s4 1983009808
    %v82 = vunpack.c.0.s8 %v81
    %v83 = vlaneseq
    %v84 = vshrl.u32 %v83, 7
    %v85 = vsub.s32 %v82, %v84
    %v86 = vrot.slane %v52, %v85
    %v88 = vunpack.c.l.s4 1983009808
    %v89 = vunpack.c.0.s8 %v88
    %v90 = vlaneseq
    %v91 = vshrl.u32 %v90, 7
    %v92 = vsub.s32 %v89, %v91
    %v93 = vrot.slane %v79, %v92
    %v94 = vcombine.high %v86, %v86
    %v95 = vcombine.high %v93, %v93
    %v104 = vmul.f32 %v58, %v69
    %v105 = vmul.f32 %v58, %v77
    %v106 = vmul.f32 %v58, %v76
    %v107 = vmul.f32 %v58, %v78
    %v108 = vmul.f32 %v58, %v86
    %v109 = vmul.f32 %v58, %v94
    %v110 = vmul.f32 %v58, %v93
    %v111 = vmul.f32 %v58, %v95
    %112 = vset.pattern.permute.xlu0 1
    %113 = vperm.xlu0 %112, %v50
    %v114 = vpop.permute.xlu0 %113
    %v118 = vcombine.high %v53, %v53
    %v120 = vunpack.c.l.s4 1983009808
    %v121 = vunpack.c.0.s8 %v120
    %v122 = vlaneseq
    %v123 = vshrl.u32 %v122, 7
    %v124 = vsub.s32 %v121, %v123
    %v125 = vrot.slane %v53, %v124
    %v127 = vunpack.c.l.s4 1983009808
    %v128 = vunpack.c.0.s8 %v127
    %v129 = vlaneseq
    %v130 = vshrl.u32 %v129, 7
    %v131 = vsub.s32 %v128, %v130
    %v132 = vrot.slane %v118, %v131
    %v133 = vcombine.high %v125, %v125
    %v134 = vcombine.high %v132, %v132
    %v135 = vcombine.high %v54, %v54
    %v137 = vunpack.c.l.s4 1983009808
    %v138 = vunpack.c.0.s8 %v137
    %v139 = vlaneseq
    %v140 = vshrl.u32 %v139, 7
    %v141 = vsub.s32 %v138, %v140
    %v142 = vrot.slane %v54, %v141
    %v144 = vunpack.c.l.s4 1983009808
    %v145 = vunpack.c.0.s8 %v144
    %v146 = vlaneseq
    %v147 = vshrl.u32 %v146, 7
    %v148 = vsub.s32 %v145, %v147
    %v149 = vrot.slane %v135, %v148
    %v150 = vcombine.high %v142, %v142
    %v151 = vcombine.high %v149, %v149
    %v160 = vmul.f32 %v114, %v125
    %v161 = vmul.f32 %v114, %v133
    %v162 = vmul.f32 %v114, %v132
    %v163 = vmul.f32 %v114, %v134
    %v164 = vmul.f32 %v114, %v142
    %v165 = vmul.f32 %v114, %v150
    %v166 = vmul.f32 %v114, %v149
    %v167 = vmul.f32 %v114, %v151
    %v168 = vadd.f32 %v104, %v160
    %v169 = vadd.f32 %v105, %v161
    %v170 = vadd.f32 %v106, %v162
    %v171 = vadd.f32 %v107, %v163
    %v172 = vadd.f32 %v108, %v164
    %v173 = vadd.f32 %v109, %v165
    %v174 = vadd.f32 %v110, %v166
    %v175 = vadd.f32 %v111, %v167
    %v184 = vcombine.low %v168, %v169
    %v185 = vcombine.low %v170, %v171
    %v187 = vunpack.c.l.s4 1983009808
    %v188 = vunpack.c.0.s8 %v187
    %v189 = vlaneseq
    %v190 = vshrl.u32 %v189, 7
    %v191 = vsub.s32 %v188, %v190
    %v192 = vrot.slane %v184, %v191
    %v194 = vunpack.c.l.s4 1983009808
    %v195 = vunpack.c.0.s8 %v194
    %v196 = vlaneseq
    %v197 = vshrl.u32 %v196, 7
    %v198 = vsub.s32 %v195, %v197
    %v199 = vrot.slane %v185, %v198
    %v200 = vcombine.low %v192, %v199
    %v201 = vcombine.low %v172, %v173
    %v202 = vcombine.low %v174, %v175
    %v204 = vunpack.c.l.s4 1983009808
    %v205 = vunpack.c.0.s8 %v204
    %v206 = vlaneseq
    %v207 = vshrl.u32 %v206, 7
    %v208 = vsub.s32 %v205, %v207
    %v209 = vrot.slane %v201, %v208
    %v211 = vunpack.c.l.s4 1983009808
    %v212 = vunpack.c.0.s8 %v211
    %v213 = vlaneseq
    %v214 = vshrl.u32 %v213, 7
    %v215 = vsub.s32 %v212, %v214
    %v216 = vrot.slane %v202, %v215
    %v217 = vcombine.low %v209, %v216
    %220 = vst [vmem:[#allocation8] sm:$0xff] %v200
    %221 = vst [vmem:[#allocation8 + $0x8] sm:$0xff] %v217
    // Predicated region
    $region26: #{tpu_custom_call.1} parent=1 // pred_check
      _
    $region27: #{tpu_custom_call.1} parent=1 // pred_check_branch
      %223 = sbr.rel (0) target = $region29
    $region28: #{tpu_custom_call.1} parent=1 // pred_region
      %s225 = ssub.s32 256, 256
      %226 = vsyncadd [#allocation4], %s225
      %s228 = sshll.u32 [#allocation8], 4
      %s229 = int_to_ptr.vmem [resolvable:$true] %s228
      %231 = dma.vmem_to_hbm [thread:$0]  %s229, 256, %s3, [#allocation4]
    $region29: #{tpu_custom_call.1} parent=1 // pred_fallthru
      _
    // Predicated region
    $region30: #{tpu_custom_call.1} parent=1 // pred_check
      _
    $region31: #{tpu_custom_call.1} parent=1 // pred_check_branch
      %233 = sbr.rel (0) target = $region33
    $region32: #{tpu_custom_call.1} parent=1 // pred_region
      %234 = dma.done [#allocation4], 256
    $region33: #{tpu_custom_call.1} parent=1 // pred_fallthru
      _
    %235 = vsyncpa [#allocation3], 1
    %236 = vsyncpa [#allocation6], 1
    %237 = vsyncpa [#allocation4], 1

</llo_original>
